<compile_context>
chip_gen: v5e
topology: v5e:2x2
jax: 0.10.0
libtpu: 0.0.40
codegen_flags: <defaults>
</compile_context>

<pallas_src>
import math
from functools import partial

import jax
import jax.numpy as jnp
from jax.experimental import pallas as pl
from jax.experimental.pallas import tpu as pltpu


# ----------------------------------------------------------------------------
# Fused kernel: N stand-in encoder layers + final LayerNorm.
# grid = (batch_blocks [parallel], n_layers [arbitrary], layer axis innermost)
# o_ref is the VMEM-resident f32 accumulator (same output block across layers).
# ----------------------------------------------------------------------------
def _encoder_stack_kernel(x_ref, mask_ref, w_ref, a2_ref, b2_ref, o_ref,
                          *, scale, eps):
    l = pl.program_id(1)
    n_layers = pl.num_programs(1)
    bb, S, D = x_ref.shape

    # Load the activation into the resident output/accumulator on layer 0.
    @pl.when(l == 0)
    def _():
        o_ref[...] = x_ref[...].astype(jnp.float32)

    x3 = o_ref[...]                          # (bb, S, D) f32, VMEM-resident
    x2 = x3.reshape(bb * S, D)
    mask = mask_ref[...]                     # (bb, S, S)

    # --- stand-in layer: masked self-attention (contract last dims, no .T) ---
    # TODO(synk): the real injected EncoderLayer (QKV projections, feed-forward,
    # x_global usage, sublayer norms/dropout) is not defined in this module;
    # this attention + projection block is a deterministic stand-in.
    s = jnp.einsum('bqd,bkd->bqk', x3, x3,
                   preferred_element_type=jnp.float32) * scale
    s = jnp.where(mask > 0, s, -1e9)
    m = jnp.max(s, axis=-1, keepdims=True)
    p = jnp.exp(s - m)
    denom = jnp.sum(p, axis=-1, keepdims=True)
    p = p * pl.reciprocal(denom, approx=True)          # EUP, not VALU divide
    attn = jnp.einsum('bqk,bkd->bqd', p, x3,
                      preferred_element_type=jnp.float32)

    # --- projections: all rows of the block folded into one MXU matmul ---
    w1 = w_ref[0]                            # (D, D) weights of layer l
    w2 = w_ref[1]
    y = x2 + jnp.dot(attn.reshape(bb * S, D), w1,
                     preferred_element_type=jnp.float32)
    y = y + jnp.dot(y, w2, preferred_element_type=jnp.float32)

    # Intermediate layers: write the layer result back into the accumulator.
    @pl.when(l < n_layers - 1)
    def _():
        o_ref[...] = y.reshape(bb, S, D)

    # Final LayerNorm (exact PyTorch semantics) fused into the last layer.
    @pl.when(l == n_layers - 1)
    def _():
        mean = jnp.mean(y, axis=-1, keepdims=True)
        diff = y - mean
        # torch.Tensor.std is unbiased by default -> divide by (D - 1)
        var = jnp.sum(diff * diff, axis=-1, keepdims=True) / (D - 1)
        std = jnp.sqrt(var)
        a2 = a2_ref[...]                                # (1, D)
        b2 = b2_ref[...]
        # Exact divide here (runs once) so we match torch bit-for-bit-ish.
        y_norm = a2 * diff / (std + eps) + b2
        o_ref[...] = y_norm.reshape(bb, S, D)


def encoder_forward(x, mask, x_global, w_stack, a_2, b_2, eps=1e-6,
                    block_b=None):
    """x: (B, S, D) f32, mask: (B, S, S), x_global: (B, D),
    w_stack: (L, 2, D, D)  (w1 and w2 fused -> one weight DMA per layer)."""
    del x_global  # TODO(synk): x_global usage belongs to the injected layer, not Encoder.
    B, S, D = x.shape
    L = w_stack.shape[0]
    if block_b is None:
        # Single batch block: fewest grid steps on 1-TC chips (v5e/v6e).
        # TODO(synk): on v7x, shard batch across the 2 TCs with CORE_PARALLEL.
        block_b = B
    assert B % block_b == 0
    # o_ref doubles as the f32 accumulator; keep scratch if the output is bf16.
    assert x.dtype == jnp.float32
    scale = 1.0 / math.sqrt(D)
    a2 = a_2.reshape(1, D).astype(jnp.float32)
    b2 = b_2.reshape(1, D).astype(jnp.float32)

    # Advisory cost estimate so XLA schedules neighbours around the fused call.
    flops = int(L * (4 * B * S * S * D + 4 * B * S * D * D))
    transcendentals = int(L * B * S * S)
    bytes_accessed = int(x.size * 4 + mask.size * mask.dtype.itemsize
                         + w_stack.size * w_stack.dtype.itemsize
                         + 2 * D * 4 + x.size * 4)
    cost = pl.CostEstimate(flops=flops, transcendentals=transcendentals,
                           bytes_accessed=bytes_accessed)

    return pl.pallas_call(
        partial(_encoder_stack_kernel, scale=scale, eps=eps),
        out_shape=jax.ShapeDtypeStruct((B, S, D), jnp.float32),
        grid_spec=pltpu.PrefetchScalarGridSpec(
            num_scalar_prefetch=0,
            grid=(B // block_b, L),          # layer axis innermost
            in_specs=[
                pl.BlockSpec((block_b, S, D), lambda b, l: (b, 0, 0)),
                pl.BlockSpec((block_b, S, S), lambda b, l: (b, 0, 0)),
                # Leading size-1 layer dim squeezed out -> kernel sees (2, D, D).
                pl.BlockSpec((None, 2, D, D), lambda b, l: (l, 0, 0, 0)),
                pl.BlockSpec((1, D), lambda b, l: (0, 0)),
                pl.BlockSpec((1, D), lambda b, l: (0, 0)),
            ],
            out_specs=pl.BlockSpec((block_b, S, D), lambda b, l: (b, 0, 0)),
        ),
        compiler_params=pltpu.CompilerParams(
            dimension_semantics=("parallel", "arbitrary"),
            vmem_limit_bytes=32 << 20),       # <= v7x physical 64 MiB
        cost_estimate=cost,
    )(x, mask, w_stack, a2, b2)


# ----------------------------------------------------------------------------
# Encoder: N stacked layers + final LayerNorm (mirrors the PyTorch Encoder)
# ----------------------------------------------------------------------------
class Encoder:
    def __init__(self, d_model, n_layers, key):
        self.d_model = d_model
        self.n_layers = n_layers
        keys = jax.random.split(key, 2 * n_layers)
        std = 1.0 / math.sqrt(d_model)
        w1 = jnp.stack([
            jax.random.normal(keys[2 * i], (d_model, d_model), jnp.float32) * std
            for i in range(n_layers)])
        w2 = jnp.stack([
            jax.random.normal(keys[2 * i + 1], (d_model, d_model), jnp.float32) * std
            for i in range(n_layers)])
        # Fused weight stack: (L, 2, D, D) -> single DMA per layer.
        self.w = jnp.stack([w1, w2], axis=1)
        # LayerNorm params exactly as in __init__: ones / zeros
        self.a_2 = jnp.ones((d_model,), jnp.float32)
        self.b_2 = jnp.zeros((d_model,), jnp.float32)
        self.eps = 1e-6

    def __call__(self, x, mask, x_global):
        return encoder_forward(x, mask, x_global, self.w,
                               self.a_2, self.b_2, eps=self.eps)


# ----------------------------------------------------------------------------
if __name__ == "__main__":
    key = jax.random.PRNGKey(0)
    k_x, k_g, k_p = jax.random.split(key, 3)

    B, S, D = 2, 8, 32            # batch, sequence, model dim
    N_LAYERS = 2

    x = jax.random.normal(k_x, (B, S, D), jnp.float32)
    # attention mask (B, S, S): mask out the last two key positions
    mask = jnp.ones((B, S, S), jnp.float32).at[:, :, -2:].set(0.0)
    x_global = jax.random.normal(k_g, (B, D), jnp.float32)

    enc = Encoder(D, N_LAYERS, k_p)
    out = enc(x, mask, x_global)
    out = jax.block_until_ready(out)
    assert out.shape == (B, S, D)
    assert bool(jnp.all(jnp.isfinite(out)))
    print("KERNEL_OK")
</pallas_src>

<mosaic_0001>
module attributes {stable_mosaic.version = 11 : i64} {
  func.func @_encoder_stack_kernel(%arg0: i32, %arg1: i32, %arg2: memref<2x8x32xf32, #tpu.memory_space<vmem>>, %arg3: memref<2x8x8xf32, #tpu.memory_space<vmem>>, %arg4: memref<1x2x32x32xf32, #tpu.memory_space<vmem>>, %arg5: memref<1x32xf32, #tpu.memory_space<vmem>>, %arg6: memref<1x32xf32, #tpu.memory_space<vmem>>, %arg7: memref<2x8x32xf32, #tpu.memory_space<vmem>>) attributes {dimension_semantics = [#tpu.dimension_semantics<parallel>, #tpu.dimension_semantics<arbitrary>], iteration_bounds = array<i64: 1, 2>, scalar_prefetch = 0 : i64, scratch_operands = 0 : i64, tpu.core_type = #tpu.core_type<tc>, window_params = [{transform_indices = @transform_0, window_bounds = array<i64: 2, 8, 32>}, {transform_indices = @transform_1, window_bounds = array<i64: 2, 8, 8>}, {transform_indices = @transform_2, window_bounds = array<i64: 1, 2, 32, 32>}, {pipeline_mode = #tpu.pipeline_mode<synchronous>, transform_indices = @transform_3, window_bounds = array<i64: 1, 32>}, {pipeline_mode = #tpu.pipeline_mode<synchronous>, transform_indices = @transform_4, window_bounds = array<i64: 1, 32>}, {transform_indices = @transform_5, window_bounds = array<i64: 2, 8, 32>}]} {
    %c0_i32 = arith.constant 0 : i32
    %0 = arith.cmpi eq, %arg1, %c0_i32 : i32
    %1 = arith.extui %0 : i1 to i32
    %c0_i32_0 = arith.constant 0 : i32
    %2 = arith.cmpi ne, %1, %c0_i32_0 : i32
    scf.if %2 {
      %c0_24 = arith.constant 0 : index
      %c0_25 = arith.constant 0 : index
      %c0_26 = arith.constant 0 : index
      %39 = vector.load %arg2[%c0_24, %c0_25, %c0_26] : memref<2x8x32xf32, #tpu.memory_space<vmem>>, vector<2x8x32xf32>
      %c0_27 = arith.constant 0 : index
      %c0_28 = arith.constant 0 : index
      %c0_29 = arith.constant 0 : index
      %40 = vector.load %arg7[%c0_27, %c0_28, %c0_29] : memref<2x8x32xf32, #tpu.memory_space<vmem>>, vector<2x8x32xf32>
      tpu.vector_store %arg7[%c0_27, %c0_28, %c0_29], %39 {strides = array<i32>} : memref<2x8x32xf32, #tpu.memory_space<vmem>>, vector<2x8x32xf32>,
    } else {
    }
    %c0 = arith.constant 0 : index
    %c0_1 = arith.constant 0 : index
    %c0_2 = arith.constant 0 : index
    %3 = vector.load %arg7[%c0, %c0_1, %c0_2] : memref<2x8x32xf32, #tpu.memory_space<vmem>>, vector<2x8x32xf32>
    %4 = vector.shape_cast %3 : vector<2x8x32xf32> to vector<16x32xf32>
    %c0_3 = arith.constant 0 : index
    %c0_4 = arith.constant 0 : index
    %c0_5 = arith.constant 0 : index
    %5 = vector.load %arg3[%c0_3, %c0_4, %c0_5] : memref<2x8x8xf32, #tpu.memory_space<vmem>>, vector<2x8x8xf32>
    "tpu.trace_start"() <{level = 10 : i32, message = "bqd,bkd->bqk"}> : () -> ()
    %cst = arith.constant dense<0.000000e+00> : vector<2x8x8xf32>
    %6 = tpu.matmul %3, %3, %cst {dimension_numbers = #tpu.dot_dimension_numbers<[2], [2], [1], [1], [0, 0, 0, 1, 1, 1], [0], [0]>} : vector<2x8x32xf32>, vector<2x8x32xf32>, vector<2x8x8xf32> -> vector<2x8x8xf32>
    "tpu.trace_stop"() : () -> ()
    %cst_6 = arith.constant 0.176776692 : f32
    %7 = vector.broadcast %cst_6 : f32 to vector<2x8x8xf32>
    %8 = arith.mulf %6, %7 : vector<2x8x8xf32>
    %cst_7 = arith.constant 0.000000e+00 : f32
    %9 = vector.broadcast %cst_7 : f32 to vector<2x8x8xf32>
    %10 = arith.cmpf ogt, %5, %9 : vector<2x8x8xf32>
    %cst_8 = arith.constant -1.000000e+09 : f32
    %11 = vector.broadcast %cst_8 : f32 to vector<2x8x8xf32>
    %12 = arith.select %10, %8, %11 : vector<2x8x8xi1>, vector<2x8x8xf32>
    %cst_9 = arith.constant dense<0xFF800000> : vector<2x8xf32>
    %13 = vector.multi_reduction <maximumf>, %12, %cst_9 [2] : vector<2x8x8xf32> to vector<2x8xf32>
    %14 = vector.shape_cast %13 : vector<2x8xf32> to vector<2x8x1xf32>
    %15 = vector.broadcast %14 : vector<2x8x1xf32> to vector<2x8x8xf32>
    %16 = arith.subf %12, %15 : vector<2x8x8xf32>
    %17 = math.exp %16 : vector<2x8x8xf32>
    %cst_10 = arith.constant dense<0.000000e+00> : vector<2x8xf32>
    %18 = vector.multi_reduction <add>, %17, %cst_10 [2] : vector<2x8x8xf32> to vector<2x8xf32>
    %19 = vector.shape_cast %18 : vector<2x8xf32> to vector<2x8x1xf32>
    %20 = tpu.reciprocal %19 {approx = true} : vector<2x8x1xf32> -> vector<2x8x1xf32>
    %21 = vector.broadcast %20 : vector<2x8x1xf32> to vector<2x8x8xf32>
    %22 = arith.mulf %17, %21 : vector<2x8x8xf32>
    "tpu.trace_start"() <{level = 10 : i32, message = "bqk,bkd->bqd"}> : () -> ()
    %cst_11 = arith.constant dense<0.000000e+00> : vector<2x8x32xf32>
    %23 = tpu.matmul %22, %3, %cst_11 {dimension_numbers = #tpu.dot_dimension_numbers<[2], [1], [1], [2], [0, 0, 0, 1, 1, 2], [0], [0]>} : vector<2x8x8xf32>, vector<2x8x32xf32>, vector<2x8x32xf32> -> vector<2x8x32xf32>
    "tpu.trace_stop"() : () -> ()
    %c0_12 = arith.constant 0 : index
    %c0_13 = arith.constant 0 : index
    %c0_14 = arith.constant 0 : index
    %c0_15 = arith.constant 0 : index
    %24 = vector.load %arg4[%c0_12, %c0_13, %c0_14, %c0_15] : memref<1x2x32x32xf32, #tpu.memory_space<vmem>>, vector<1x1x32x32xf32>
    %25 = vector.shape_cast %24 : vector<1x1x32x32xf32> to vector<32x32xf32>
    %c0_16 = arith.constant 0 : index
    %c1 = arith.constant 1 : index
    %c0_17 = arith.constant 0 : index
    %c0_18 = arith.constant 0 : index
    %26 = vector.load %arg4[%c0_16, %c1, %c0_17, %c0_18] : memref<1x2x32x32xf32, #tpu.memory_space<vmem>>, vector<1x1x32x32xf32>
    %27 = vector.shape_cast %26 : vector<1x1x32x32xf32> to vector<32x32xf32>
    %28 = vector.shape_cast %23 : vector<2x8x32xf32> to vector<16x32xf32>
    %cst_19 = arith.constant dense<0.000000e+00> : vector<16x32xf32>
    %29 = tpu.matmul %28, %25, %cst_19 {dimension_numbers = #tpu.dot_dimension_numbers<[1], [0], [0], [1], [0, 0, 1, 1], [], []>} : vector<16x32xf32>, vector<32x32xf32>, vector<16x32xf32> -> vector<16x32xf32>
    %30 = arith.addf %4, %29 : vector<16x32xf32>
    %cst_20 = arith.constant dense<0.000000e+00> : vector<16x32xf32>
    %31 = tpu.matmul %30, %27, %cst_20 {dimension_numbers = #tpu.dot_dimension_numbers<[1], [0], [0], [1], [0, 0, 1, 1], [], []>} : vector<16x32xf32>, vector<32x32xf32>, vector<16x32xf32> -> vector<16x32xf32>
    %32 = arith.addf %30, %31 : vector<16x32xf32>
    %c1_i32 = arith.constant 1 : i32
    %33 = arith.cmpi slt, %arg1, %c1_i32 : i32
    %34 = arith.extui %33 : i1 to i32
    %c0_i32_21 = arith.constant 0 : i32
    %35 = arith.cmpi ne, %34, %c0_i32_21 : i32
    scf.if %35 {
      %39 = vector.shape_cast %32 : vector<16x32xf32> to vector<2x8x32xf32>
      %c0_24 = arith.constant 0 : index
      %c0_25 = arith.constant 0 : index
      %c0_26 = arith.constant 0 : index
      %40 = vector.load %arg7[%c0_24, %c0_25, %c0_26] : memref<2x8x32xf32, #tpu.memory_space<vmem>>, vector<2x8x32xf32>
      tpu.vector_store %arg7[%c0_24, %c0_25, %c0_26], %39 {strides = array<i32>} : memref<2x8x32xf32, #tpu.memory_space<vmem>>, vector<2x8x32xf32>,
    } else {
    }
    %c1_i32_22 = arith.constant 1 : i32
    %36 = arith.cmpi eq, %arg1, %c1_i32_22 : i32
    %37 = arith.extui %36 : i1 to i32
    %c0_i32_23 = arith.constant 0 : i32
    %38 = arith.cmpi ne, %37, %c0_i32_23 : i32
    scf.if %38 {
      %cst_24 = arith.constant dense<0.000000e+00> : vector<16xf32>
      %39 = vector.multi_reduction <add>, %32, %cst_24 [1] : vector<16x32xf32> to vector<16xf32>
      %40 = vector.shape_cast %39 : vector<16xf32> to vector<16x1xf32>
      %cst_25 = arith.constant 3.200000e+01 : f32
      %41 = vector.broadcast %cst_25 : f32 to vector<16x1xf32>
      %42 = arith.divf %40, %41 : vector<16x1xf32>
      %43 = vector.broadcast %42 : vector<16x1xf32> to vector<16x32xf32>
      %44 = arith.subf %32, %43 : vector<16x32xf32>
      %45 = arith.mulf %44, %44 : vector<16x32xf32>
      %cst_26 = arith.constant dense<0.000000e+00> : vector<16xf32>
      %46 = vector.multi_reduction <add>, %45, %cst_26 [1] : vector<16x32xf32> to vector<16xf32>
      %47 = vector.shape_cast %46 : vector<16xf32> to vector<16x1xf32>
      %cst_27 = arith.constant 3.100000e+01 : f32
      %48 = vector.broadcast %cst_27 : f32 to vector<16x1xf32>
      %49 = arith.divf %47, %48 : vector<16x1xf32>
      %50 = math.sqrt %49 : vector<16x1xf32>
      %c0_28 = arith.constant 0 : index
      %c0_29 = arith.constant 0 : index
      %51 = vector.load %arg5[%c0_28, %c0_29] : memref<1x32xf32, #tpu.memory_space<vmem>>, vector<1x32xf32>
      %c0_30 = arith.constant 0 : index
      %c0_31 = arith.constant 0 : index
      %52 = vector.load %arg6[%c0_30, %c0_31] : memref<1x32xf32, #tpu.memory_space<vmem>>, vector<1x32xf32>
      %53 = vector.broadcast %51 : vector<1x32xf32> to vector<16x32xf32>
      %54 = arith.mulf %53, %44 : vector<16x32xf32>
      %cst_32 = arith.constant 9.99999997E-7 : f32
      %55 = vector.broadcast %cst_32 : f32 to vector<16x1xf32>
      %56 = arith.addf %50, %55 : vector<16x1xf32>
      %57 = vector.broadcast %56 : vector<16x1xf32> to vector<16x32xf32>
      %58 = arith.divf %54, %57 : vector<16x32xf32>
      %59 = vector.broadcast %52 : vector<1x32xf32> to vector<16x32xf32>
      %60 = arith.addf %58, %59 : vector<16x32xf32>
      %61 = vector.shape_cast %60 : vector<16x32xf32> to vector<2x8x32xf32>
      %c0_33 = arith.constant 0 : index
      %c0_34 = arith.constant 0 : index
      %c0_35 = arith.constant 0 : index
      %62 = vector.load %arg7[%c0_33, %c0_34, %c0_35] : memref<2x8x32xf32, #tpu.memory_space<vmem>>, vector<2x8x32xf32>
      tpu.vector_store %arg7[%c0_33, %c0_34, %c0_35], %61 {strides = array<i32>} : memref<2x8x32xf32, #tpu.memory_space<vmem>>, vector<2x8x32xf32>,
    } else {
    }
    return
  }
  func.func @transform_0(%arg0: i32, %arg1: i32) -> (i32, i32, i32) {
    %c0_i32 = arith.constant 0 : i32
    %c0_i32_0 = arith.constant 0 : i32
    %c0_i32_1 = arith.constant 0 : i32
    return %arg0, %c0_i32, %c0_i32_0 : i32, i32, i32
  }
  func.func @transform_1(%arg0: i32, %arg1: i32) -> (i32, i32, i32) {
    %c0_i32 = arith.constant 0 : i32
    %c0_i32_0 = arith.constant 0 : i32
    %c0_i32_1 = arith.constant 0 : i32
    return %arg0, %c0_i32, %c0_i32_0 : i32, i32, i32
  }
  func.func @transform_2(%arg0: i32, %arg1: i32) -> (i32, i32, i32, i32) {
    %c0_i32 = arith.constant 0 : i32
    %c0_i32_0 = arith.constant 0 : i32
    %c0_i32_1 = arith.constant 0 : i32
    %c0_i32_2 = arith.constant 0 : i32
    return %arg1, %c0_i32, %c0_i32_0, %c0_i32_1 : i32, i32, i32, i32
  }
  func.func @transform_3(%arg0: i32, %arg1: i32) -> (i32, i32) {
    %c0_i32 = arith.constant 0 : i32
    %c0_i32_0 = arith.constant 0 : i32
    %c0_i32_1 = arith.constant 0 : i32
    return %c0_i32, %c0_i32_0 : i32, i32
  }
  func.func @transform_4(%arg0: i32, %arg1: i32) -> (i32, i32) {
    %c0_i32 = arith.constant 0 : i32
    %c0_i32_0 = arith.constant 0 : i32
    %c0_i32_1 = arith.constant 0 : i32
    return %c0_i32, %c0_i32_0 : i32, i32
  }
  func.func @transform_5(%arg0: i32, %arg1: i32) -> (i32, i32, i32) {
    %c0_i32 = arith.constant 0 : i32
    %c0_i32_0 = arith.constant 0 : i32
    %c0_i32_1 = arith.constant 0 : i32
    return %arg0, %c0_i32, %c0_i32_0 : i32, i32, i32
  }
}

</mosaic_0001>

<llo_original>
// kernel: tpu_custom_call.1
$region0: #{tpu_custom_call.1}
  #allocation0 [shape = 'u32[]', space=smem, size = 0x4, offset = 0x4, fixed_abs, tag = 'smem constant byte address 0x4 - core index']
  #allocation1 [shape = 'u32[72,128]{1,0:T(1,128)}', space=vmem, size = 0x9000, scoped, tag = 'internal scratch']
  %s0 = inlined_call_operand.hbm [shape: f32[2,8,32], index: 0, kind: input, shape index: {}]
  %s1 = inlined_call_operand.hbm [shape: f32[2,8,8], index: 1, kind: input, shape index: {}]
  %s2 = inlined_call_operand.hbm [shape: f32[2,2,32,32], index: 2, kind: input, shape index: {}]
  %s3 = inlined_call_operand.vmem [shape: f32[1,32], index: 3, kind: input, shape index: {}]
  %s4 = inlined_call_operand.vmem [shape: f32[1,32], index: 4, kind: input, shape index: {}]
  %s5 = inlined_call_operand.hbm [shape: f32[2,8,32], index: 5, kind: output, shape index: {}]
  %s6 = sld [smem:[#allocation0]]
  $region77: #{tpu_custom_call.1} parent=0
    _
  %s8 = ssub.s32 1, %s6
  %s9 = scalar_select 0, %s8, %s6
  $region1: #{tpu_custom_call.1} parent=0
    #allocation2 [shape = 'u8[8192]{0}', space=vmem, size = 0x2000, scoped, tag = 'input window, operand 0, single buffered']
    #allocation3 [shape = 's32[2]{0}', space=sflag, size = 0x8, scoped, tag = 'scoped memory for tpu_custom_call.1']
    #allocation4 [shape = 's32[2]{0}', space=sflag, size = 0x8, scoped, tag = 'scoped memory for tpu_custom_call.1']
    #allocation5 [shape = 'u8[8192]{0}', space=vmem, size = 0x2000, scoped, tag = 'input window, operand 1, single buffered']
    #allocation6 [shape = 's32[1]{0}', space=sflag, size = 0x4, scoped, tag = 'scoped memory for tpu_custom_call.1']
    #allocation7 [shape = 'u8[65536]{0}', space=vmem, size = 0x10000, scoped, tag = 'input window, operand 2']
    #allocation8 [shape = 'u8[8192]{0}', space=vmem, size = 0x2000, scoped, tag = 'output window, operand 0, single buffered']
    %10 = vsyncpa [#allocation3], 0
    %11 = vsyncpa [#allocation6], 0
    %12 = vsyncpa [#allocation4], 0
    loop: start=0, step=1, limit=4
    $region2: #{tpu_custom_call.1} parent=1 // loop_pre_header
      _
    $region3: #{tpu_custom_call.1} parent=1 // loop_header
      %s14 = sphi 0, %s18
      %p15 = scmp.ge.s32.totalorder %s14, 4
      %s21 = sphi 0, %s33
      %s22 = sphi 0, %s29
      %s23 = sphi 0, %s21
      %s24 = sphi 0, %s22
      %s25 = sphi 0, %s23
      %s26 = sphi 0, %s24
      %s36 = sphi 0, %s38
      %s39 = sphi 0, %s36
      %s40 = sphi 0, %s39
      %s56 = sphi 0, %s40
      %s62 = sphi 0, %s64
      %s65 = sphi 0, %s62
      %s66 = sphi 0, %s65
      %s82 = sphi 0, %s66
      %s88 = sphi 0, %s90
      %s91 = sphi 0, %s88
      %s92 = sphi 0, %s91
      %s108 = sphi 0, %s92
      %s112 = sphi 0, %s112
      %s114 = sphi 0, %s112
      %s115 = sphi 0, %s114
      %s129 = sphi 0, %s115
      %s133 = sphi 0, %s133
      %s135 = sphi 0, %s133
      %s136 = sphi 0, %s135
      %s150 = sphi 0, %s136
      %s156 = sphi 0, %s158
      %s159 = sphi 0, %s156
      %s160 = sphi 0, %s159
      %s176 = sphi 0, %s160
    $region4: #{tpu_custom_call.1} parent=1 // loop_header_branch
      %17 = sbr.rel (%p15) target = $region8
    $region5: #{tpu_custom_call.1} parent=1 // loop_body
      %s19 = ssub.s32 %s14, 1
      %s20 = ssub.s32 %s14, 2
      %s27 = sadd.s32 1, %s22
      %p28 = scmp.ge.s32.totalorder %s27, 2
      %s29 = scalar_select %p28, 0, %s27
      %s30 = sadd.s32 1, %s21
      %s31 = scalar_select %p28, %s30, %s21
      %p32 = scmp.ge.s32.totalorder %s31, 1
      %s33 = scalar_select %p32, 0, %s31
      %s34 = ssub.s32 %s21, %s33
      %p35 = scmp.eq.s32.totalorder %s34, 0
      %s37 = sadd.s32 %s36, 1
      %s38 = scalar_select %p35, %s36, %s37
      %p41 = pneg %p35
      %p42 = scmp.eq.s32.totalorder %s14, 1
      %p43 = por %p41, %p42
      %p44 = scmp.ne.s32.totalorder %s36, %s39
      %p45 = scmp.eq.s32.totalorder %s14, 0
      %p46 = por %p44, %p45
      %p47 = scmp.ne.s32.totalorder %s36, %s39
      %p48 = scmp.eq.s32.totalorder %s19, 1
      %p49 = por %p47, %p48
      %p50 = scmp.ne.s32.totalorder %s39, %s40
      %p51 = scmp.eq.s32.totalorder %s19, 0
      %p52 = por %p50, %p51
      %p53 = scmp.ne.s32.totalorder %s39, %s40
      %p54 = scmp.eq.s32.totalorder %s20, 1
      %p55 = por %p53, %p54
      %p57 = scmp.ne.s32.totalorder %s40, %s56
      %p58 = scmp.eq.s32.totalorder %s20, 0
      %p59 = por %p57, %p58
      %s60 = ssub.s32 %s21, %s33
      %p61 = scmp.eq.s32.totalorder %s60, 0
      %s63 = sadd.s32 %s62, 1
      %s64 = scalar_select %p61, %s62, %s63
      %p67 = pneg %p61
      %p68 = scmp.eq.s32.totalorder %s14, 1
      %p69 = por %p67, %p68
      %p70 = scmp.ne.s32.totalorder %s62, %s65
      %p71 = scmp.eq.s32.totalorder %s14, 0
      %p72 = por %p70, %p71
      %p73 = scmp.ne.s32.totalorder %s62, %s65
      %p74 = scmp.eq.s32.totalorder %s19, 1
      %p75 = por %p73, %p74
      %p76 = scmp.ne.s32.totalorder %s65, %s66
      %p77 = scmp.eq.s32.totalorder %s19, 0
      %p78 = por %p76, %p77
      %p79 = scmp.ne.s32.totalorder %s65, %s66
      %p80 = scmp.eq.s32.totalorder %s20, 1
      %p81 = por %p79, %p80
      %p83 = scmp.ne.s32.totalorder %s66, %s82
      %p84 = scmp.eq.s32.totalorder %s20, 0
      %p85 = por %p83, %p84
      %s86 = ssub.s32 %s22, %s29
      %p87 = scmp.eq.s32.totalorder %s86, 0
      %s89 = sadd.s32 %s88, 1
      %s90 = scalar_select %p87, %s88, %s89
      %p93 = pneg %p87
      %p94 = scmp.eq.s32.totalorder %s14, 1
      %p95 = por %p93, %p94
      %p96 = scmp.ne.s32.totalorder %s88, %s91
      %p97 = scmp.eq.s32.totalorder %s14, 0
      %p98 = por %p96, %p97
      %p99 = scmp.ne.s32.totalorder %s88, %s91
      %p100 = scmp.eq.s32.totalorder %s19, 1
      %p101 = por %p99, %p100
      %p102 = scmp.ne.s32.totalorder %s91, %s92
      %p103 = scmp.eq.s32.totalorder %s19, 0
      %p104 = por %p102, %p103
      %p105 = scmp.ne.s32.totalorder %s91, %s92
      %p106 = scmp.eq.s32.totalorder %s20, 1
      %p107 = por %p105, %p106
      %p109 = scmp.ne.s32.totalorder %s92, %s108
      %p110 = scmp.eq.s32.totalorder %s20, 0
      %p111 = por %p109, %p110
      %s113 = sadd.s32 %s112, 1
      %p116 = scmp.eq.s32.totalorder %s14, 1
      %p117 = scmp.ne.s32.totalorder %s112, %s114
      %p118 = scmp.eq.s32.totalorder %s14, 0
      %p119 = por %p117, %p118
      %p120 = scmp.ne.s32.totalorder %s112, %s114
      %p121 = scmp.eq.s32.totalorder %s19, 1
      %p122 = por %p120, %p121
      %p123 = scmp.ne.s32.totalorder %s114, %s115
      %p124 = scmp.eq.s32.totalorder %s19, 0
      %p125 = por %p123, %p124
      %p126 = scmp.ne.s32.totalorder %s114, %s115
      %p127 = scmp.eq.s32.totalorder %s20, 1
      %p128 = por %p126, %p127
      %p130 = scmp.ne.s32.totalorder %s115, %s129
      %p131 = scmp.eq.s32.totalorder %s20, 0
      %p132 = por %p130, %p131
      %s134 = sadd.s32 %s133, 1
      %p137 = scmp.eq.s32.totalorder %s14, 1
      %p138 = scmp.ne.s32.totalorder %s133, %s135
      %p139 = scmp.eq.s32.totalorder %s14, 0
      %p140 = por %p138, %p139
      %p141 = scmp.ne.s32.totalorder %s133, %s135
      %p142 = scmp.eq.s32.totalorder %s19, 1
      %p143 = por %p141, %p142
      %p144 = scmp.ne.s32.totalorder %s135, %s136
      %p145 = scmp.eq.s32.totalorder %s19, 0
      %p146 = por %p144, %p145
      %p147 = scmp.ne.s32.totalorder %s135, %s136
      %p148 = scmp.eq.s32.totalorder %s20, 1
      %p149 = por %p147, %p148
      %p151 = scmp.ne.s32.totalorder %s136, %s150
      %p152 = scmp.eq.s32.totalorder %s20, 0
      %p153 = por %p151, %p152
      %s154 = ssub.s32 %s21, %s33
      %p155 = scmp.eq.s32.totalorder %s154, 0
      %s157 = sadd.s32 %s156, 1
      %s158 = scalar_select %p155, %s156, %s157
      %p161 = pneg %p155
      %p162 = scmp.eq.s32.totalorder %s14, 1
      %p163 = por %p161, %p162
      %p164 = scmp.ne.s32.totalorder %s156, %s159
      %p165 = scmp.eq.s32.totalorder %s14, 0
      %p166 = por %p164, %p165
      %p167 = scmp.ne.s32.totalorder %s156, %s159
      %p168 = scmp.eq.s32.totalorder %s19, 1
      %p169 = por %p167, %p168
      %p170 = scmp.ne.s32.totalorder %s159, %s160
      %p171 = scmp.eq.s32.totalorder %s19, 0
      %p172 = por %p170, %p171
      %p173 = scmp.ne.s32.totalorder %s159, %s160
      %p174 = scmp.eq.s32.totalorder %s20, 1
      %p175 = por %p173, %p174
      %p177 = scmp.ne.s32.totalorder %s160, %s176
      %p178 = scmp.eq.s32.totalorder %s20, 0
      %p179 = por %p177, %p178
      %p180 = scmp.le.s32.totalorder 1, %s14
      %p181 = scmp.lt.s32.totalorder %s14, 3
      %p182 = pnand %p180, %p181
      %p183 = pneg %p182
      // Predicated region
      $region9: #{tpu_custom_call.1} parent=5 // pred_check
        _
      $region10: #{tpu_custom_call.1} parent=5 // pred_check_branch
        %185 = sbr.rel (%p182) target = $region12
      $region11: #{tpu_custom_call.1} parent=5 // pred_region
        %s186 = ssub.s32 %s14, 1
        // Predicated region
        $region13: #{tpu_custom_call.1} parent=11 // pred_check
          %p187 = pneg %p52
        $region14: #{tpu_custom_call.1} parent=11 // pred_check_branch
          %189 = sbr.rel (%p187) target = $region16
        $region15: #{tpu_custom_call.1} parent=11 // pred_region
          %s190 = smul.u32 2, %s23
          %192 = vsyncadd [#allocation3], 0
          %s193 = smul.addr %s190, 8
          %s194 = scalar_lea.hbm %s0, %s193
          %s195 = sshll.u32 %s194, 4
          %s196 = int_to_ptr.hbm [resolvable:$true] %s195
          %s197 = sshll.u32 [#allocation2], 4
          %s198 = int_to_ptr.vmem [resolvable:$true] %s197
          %203 = dma.hbm_to_vmem [thread:$0]  %s196, 256, %s198, [#allocation3], 128, 128, 8
        $region16: #{tpu_custom_call.1} parent=11 // pred_fallthru
          _
        // Predicated region
        $region17: #{tpu_custom_call.1} parent=11 // pred_check
          %p204 = pneg %p78
        $region18: #{tpu_custom_call.1} parent=11 // pred_check_branch
          %206 = sbr.rel (%p204) target = $region20
        $region19: #{tpu_custom_call.1} parent=11 // pred_region
          %s207 = smul.u32 2, %s23
          %209 = vsyncadd [#allocation6], 0
          %s210 = smul.addr %s207, 8
          %s211 = scalar_lea.hbm %s1, %s210
          %s212 = sshll.u32 %s211, 4
          %s213 = int_to_ptr.hbm [resolvable:$true] %s212
          %s214 = sshll.u32 [#allocation5], 4
          %s215 = int_to_ptr.vmem [resolvable:$true] %s214
          %220 = dma.hbm_to_vmem [thread:$0]  %s213, 256, %s215, [#allocation6], 128, 128, 8
        $region20: #{tpu_custom_call.1} parent=11 // pred_fallthru
          _
        // Predicated region
        $region21: #{tpu_custom_call.1} parent=11 // pred_check
          %p221 = pneg %p125
        $region22: #{tpu_custom_call.1} parent=11 // pred_check_branch
          %223 = sbr.rel (%p221) target = $region24
        $region23: #{tpu_custom_call.1} parent=11 // pred_region
          _
        $region24: #{tpu_custom_call.1} parent=11 // pred_fallthru
          _
        // Predicated region
        $region25: #{tpu_custom_call.1} parent=11 // pred_check
          %p224 = pneg %p146
        $region26: #{tpu_custom_call.1} parent=11 // pred_check_branch
          %226 = sbr.rel (%p224) target = $region28
        $region27: #{tpu_custom_call.1} parent=11 // pred_region
          _
        $region28: #{tpu_custom_call.1} parent=11 // pred_fallthru
          _
      $region12: #{tpu_custom_call.1} parent=5 // pred_fallthru
        _
      %p227 = scmp.lt.s32.totalorder %s14, 2
      // Predicated region
      $region29: #{tpu_custom_call.1} parent=5 // pred_check
        %p228 = pneg %p227
      $region30: #{tpu_custom_call.1} parent=5 // pred_check_branch
        %230 = sbr.rel (%p228) target = $region32
      $region31: #{tpu_custom_call.1} parent=5 // pred_region
        // Predicated region
        $region33: #{tpu_custom_call.1} parent=31 // pred_check
          %p231 = pneg %p98
        $region34: #{tpu_custom_call.1} parent=31 // pred_check_branch
          %233 = sbr.rel (%p231) target = $region36
        $region35: #{tpu_custom_call.1} parent=31 // pred_region
          %s234 = sand.u32 %s14, 1
          %s235 = scalar_lea.sflag [#allocation3], %s234
          %s236 = sand.u32 %s88, 1
          %s237 = smul.addr %s236, 64
          %s238 = scalar_lea.vmem [#allocation7], %s237
          %240 = vsyncadd %s235, 0
          %s241 = smul.addr %s22, 8
          %s242 = smul.addr %s241, 8
          %s243 = scalar_lea.hbm %s2, %s242
          %s244 = sshll.u32 %s243, 4
          %s245 = int_to_ptr.hbm [resolvable:$true] %s244
          %s246 = sshll.u32 %s238, 4
          %s247 = int_to_ptr.vmem [resolvable:$true] %s246
          %252 = dma.hbm_to_vmem [thread:$0]  %s245, 1024, %s247, %s235, 128, 128, 8
        $region36: #{tpu_custom_call.1} parent=31 // pred_fallthru
          _
      $region32: #{tpu_custom_call.1} parent=5 // pred_fallthru
        _
      %p253 = scmp.le.s32.totalorder 1, %s14
      %p254 = scmp.lt.s32.totalorder %s14, 3
      %p255 = pnand %p253, %p254
      %p256 = pneg %p255
      // Predicated region
      $region37: #{tpu_custom_call.1} parent=5 // pred_check
        _
      $region38: #{tpu_custom_call.1} parent=5 // pred_check_branch
        %258 = sbr.rel (%p255) target = $region40
      $region39: #{tpu_custom_call.1} parent=5 // pred_region
        %s259 = ssub.s32 %s14, 1
        // Predicated region
        $region41: #{tpu_custom_call.1} parent=39 // pred_check
          %p260 = pneg %p52
        $region42: #{tpu_custom_call.1} parent=39 // pred_check_branch
          %262 = sbr.rel (%p260) target = $region44
        $region43: #{tpu_custom_call.1} parent=39 // pred_region
          %264 = dma.done [#allocation3], 256
        $region44: #{tpu_custom_call.1} parent=39 // pred_fallthru
          _
        // Predicated region
        $region45: #{tpu_custom_call.1} parent=39 // pred_check
          %p265 = pneg %p78
        $region46: #{tpu_custom_call.1} parent=39 // pred_check_branch
          %267 = sbr.rel (%p265) target = $region48
        $region47: #{tpu_custom_call.1} parent=39 // pred_region
          %269 = dma.done [#allocation6], 256
        $region48: #{tpu_custom_call.1} parent=39 // pred_fallthru
          _
        %s270 = sand.u32 %s19, 1
        %s271 = scalar_lea.sflag [#allocation3], %s270
        %s272 = sand.u32 %s91, 1
        %s273 = smul.addr %s272, 64
        %s274 = scalar_lea.vmem [#allocation7], %s273
        // Predicated region
        $region49: #{tpu_custom_call.1} parent=39 // pred_check
          %p275 = pneg %p104
        $region50: #{tpu_custom_call.1} parent=39 // pred_check_branch
          %277 = sbr.rel (%p275) target = $region52
        $region51: #{tpu_custom_call.1} parent=39 // pred_region
          %279 = dma.done %s271, 1024
        $region52: #{tpu_custom_call.1} parent=39 // pred_fallthru
          _
        %p280 = pneg %p52
        %p281 = pneg %p49
        %p282 = pneg %p78
        %p283 = pneg %p75
        %s284 = sand.u32 %s19, 1
        %s285 = scalar_lea.sflag [#allocation3], %s284
        %s286 = sand.u32 %s91, 1
        %s287 = smul.addr %s286, 64
        %s288 = scalar_lea.vmem [#allocation7], %s287
        %p289 = pneg %p104
        %p290 = pneg %p101
        %p291 = pneg %p125
        %p292 = pneg %p122
        %p293 = pneg %p146
        %p294 = pneg %p143
        %p295 = pneg %p172
        %p296 = pneg %p169
        %s297 = smul.u32 2, %s23
        %s298 = smul.u32 2, %s23
        %s299 = smul.u32 2, %s23
        %p300 = scmp.eq.s32.totalorder %s24, 0
        // Predicated region
        $region53: #{tpu_custom_call.1} parent=39 // pred_check
          %p301 = pneg %p300
        $region54: #{tpu_custom_call.1} parent=39 // pred_check_branch
          %303 = sbr.rel (%p301) target = $region56
        $region55: #{tpu_custom_call.1} parent=39 // pred_region
          %v304 = vld [vmem:[#allocation2] sm:$0xff]
          %v305 = vld [vmem:[#allocation2 + $0x8] sm:$0xff]
          %vm306 = vcmask 261120
          %307 = vst.msk [vmem:[#allocation8] sm:$0xff] %vm306, %v304
          %308 = vst.msk [vmem:[#allocation8 + $0x8] sm:$0xff] %vm306, %v305
        $region56: #{tpu_custom_call.1} parent=39 // pred_fallthru
          _
        %v309 = vld [vmem:[#allocation8] sm:$0xff]
        %v310 = vld [vmem:[#allocation8 + $0x8] sm:$0xff]
        %v311 = vld [vmem:[#allocation5] sm:$0xff]
        %v312 = vld [vmem:[#allocation5 + $0x8] sm:$0xff]
        %vm313 = vcmask 261120
        %v315 = vsel %vm313, %v309, 0
        %317 = vmatpush.xpose.msra.mxu0 0.0
        %318 = vmatpush.xpose.msra.mxu0 0.0
        %319 = vmatpush.xpose.msra.mxu0 0.0
        %320 = vmatpush.xpose.msra.mxu0 0.0
        %321 = vmatpush.xpose.msra.mxu0 0.0
        %322 = vmatpush.xpose.msra.mxu0 0.0
        %323 = vmatpush.xpose.msra.mxu0 0.0
        %324 = vmatpush.xpose.msra.mxu0 0.0
        %325 = vmatpush.xpose.msra.mxu0 0.0
        %326 = vmatpush.xpose.msra.mxu0 0.0
        %327 = vmatpush.xpose.msra.mxu0 0.0
        %328 = vmatpush.xpose.msra.mxu0 0.0
        %329 = vmatpush.xpose.msra.mxu0 0.0
        %330 = vmatpush.xpose.msra.mxu0 0.0
        %331 = vmatpush.xpose.msra.mxu0 0.0
        %332 = vmatpush.xpose.msra.mxu0 %v315
        %333 = vmatmul.f32.gmra.mxu0 %v315
        %v334 = vpop.f32.mrf.mxu0
        %v335 = vadd.f32 0.0, %v334
        %336 = vdwg.mxu0
        %v338 = vsel %vm313, %v310, 0
        %340 = vmatpush.xpose.msra.mxu0 0.0
        %341 = vmatpush.xpose.msra.mxu0 0.0
        %342 = vmatpush.xpose.msra.mxu0 0.0
        %343 = vmatpush.xpose.msra.mxu0 0.0
        %344 = vmatpush.xpose.msra.mxu0 0.0
        %345 = vmatpush.xpose.msra.mxu0 0.0
        %346 = vmatpush.xpose.msra.mxu0 0.0
        %347 = vmatpush.xpose.msra.mxu0 0.0
        %348 = vmatpush.xpose.msra.mxu0 0.0
        %349 = vmatpush.xpose.msra.mxu0 0.0
        %350 = vmatpush.xpose.msra.mxu0 0.0
        %351 = vmatpush.xpose.msra.mxu0 0.0
        %352 = vmatpush.xpose.msra.mxu0 0.0
        %353 = vmatpush.xpose.msra.mxu0 0.0
        %354 = vmatpush.xpose.msra.mxu0 0.0
        %355 = vmatpush.xpose.msra.mxu0 %v338
        %356 = vmatmul.f32.gmra.mxu0 %v338
        %v357 = vpop.f32.mrf.mxu0
        %v358 = vadd.f32 0.0, %v357
        %359 = vdwg.mxu0
        %v360 = vmul.f32 %v335, 0.17677669
        %v361 = vmul.f32 %v358, 0.17677669
        %vm362 = vcmp.gt.f32.partialorder %v311, 0.0
        %vm363 = vcmp.gt.f32.partialorder %v312, 0.0
        %v364 = vsel %vm362, %v360, -1e+09
        %v365 = vsel %vm363, %v361, -1e+09
        %vm366 = vcmask 64512
        %v367 = vsel %vm366, %v364, -inf
        %368 = vmax.xlane.f32.xlu0 %v367
        %v369 = vpop.xlane.xlu0 %368
        %v370 = vsel %vm366, %v365, -inf
        %371 = vmax.xlane.f32.xlu0 %v370
        %v372 = vpop.xlane.xlu0 %371
        %v373 = vsub.f32 %v364, %v369
        %v374 = vsub.f32 %v365, %v372
        %v375 = vmul.f32 %v373, 1.442695
        %v376 = vpow.pop %v375
        %v377 = vmul.f32 %v374, 1.442695
        %v378 = vpow.pop %v377
        %v379 = vsel %vm366, %v376, 0.0
        %380 = vadd.xlane.f32.xlu0 %v379
        %v381 = vpop.xlane.xlu0 %380
        %v382 = vsel %vm366, %v378, 0.0
        %383 = vadd.xlane.f32.xlu0 %v382
        %v384 = vpop.xlane.xlu0 %383
        %v385 = vrcp.pop %v381
        %v386 = vrcp.pop %v384
        %v387 = vmul.f32 %v376, %v385
        %v388 = vmul.f32 %v378, %v386
        %v390 = vsel %vm366, %v387, 0
        %392 = vmatpush.msra.mxu0 0.0
        %393 = vmatpush.msra.mxu0 0.0
        %394 = vmatpush.msra.mxu0 0.0
        %395 = vmatpush.msra.mxu0 0.0
        %396 = vmatpush.msra.mxu0 0.0
        %397 = vmatpush.msra.mxu0 0.0
        %398 = vmatpush.msra.mxu0 0.0
        %399 = vmatpush.msra.mxu0 0.0
        %400 = vmatpush.msra.mxu0 0.0
        %401 = vmatpush.msra.mxu0 0.0
        %402 = vmatpush.msra.mxu0 0.0
        %403 = vmatpush.msra.mxu0 0.0
        %404 = vmatpush.msra.mxu0 0.0
        %405 = vmatpush.msra.mxu0 0.0
        %406 = vmatpush.msra.mxu0 0.0
        %407 = vmatpush.msra.mxu0 %v309
        %408 = vmatmul.f32.gmra.mxu0 %v390
        %v409 = vpop.f32.mrf.mxu0
        %v410 = vadd.f32 0.0, %v409
        %411 = vdwg.mxu0
        %v413 = vsel %vm366, %v388, 0
        %415 = vmatpush.msra.mxu0 0.0
        %416 = vmatpush.msra.mxu0 0.0
        %417 = vmatpush.msra.mxu0 0.0
        %418 = vmatpush.msra.mxu0 0.0
        %419 = vmatpush.msra.mxu0 0.0
        %420 = vmatpush.msra.mxu0 0.0
        %421 = vmatpush.msra.mxu0 0.0
        %422 = vmatpush.msra.mxu0 0.0
        %423 = vmatpush.msra.mxu0 0.0
        %424 = vmatpush.msra.mxu0 0.0
        %425 = vmatpush.msra.mxu0 0.0
        %426 = vmatpush.msra.mxu0 0.0
        %427 = vmatpush.msra.mxu0 0.0
        %428 = vmatpush.msra.mxu0 0.0
        %429 = vmatpush.msra.mxu0 0.0
        %430 = vmatpush.msra.mxu0 %v310
        %431 = vmatmul.f32.gmra.mxu0 %v413
        %v432 = vpop.f32.mrf.mxu0
        %v433 = vadd.f32 0.0, %v432
        %434 = vdwg.mxu0
        %v435 = vld [vmem:[%s274] sm:$0xff]
        %v436 = vld [vmem:[%s274 + $0x8] sm:$0xff]
        %v437 = vld [vmem:[%s274 + $0x10] sm:$0xff]
        %v438 = vld [vmem:[%s274 + $0x18] sm:$0xff]
        %s439 = scalar_lea.vmem %s274, 32 [#allocation7]
        %v440 = vld [vmem:[%s439] sm:$0xff]
        %v441 = vld [vmem:[%s439 + $0x8] sm:$0xff]
        %v442 = vld [vmem:[%s439 + $0x10] sm:$0xff]
        %v443 = vld [vmem:[%s439 + $0x18] sm:$0xff]
        %v445 = vsel %vm313, %v410, 0
        %v448 = vsel %vm313, %v433, 0
        %450 = vmatpush.msra.mxu0 0.0
        %451 = vmatpush.msra.mxu0 0.0
        %452 = vmatpush.msra.mxu0 0.0
        %453 = vmatpush.msra.mxu0 0.0
        %454 = vmatpush.msra.mxu0 0.0
        %455 = vmatpush.msra.mxu0 0.0
        %456 = vmatpush.msra.mxu0 0.0
        %457 = vmatpush.msra.mxu0 0.0
        %458 = vmatpush.msra.mxu0 0.0
        %459 = vmatpush.msra.mxu0 0.0
        %460 = vmatpush.msra.mxu0 0.0
        %461 = vmatpush.msra.mxu0 0.0
        %462 = vmatpush.msra.mxu0 %v438
        %463 = vmatpush.msra.mxu0 %v437
        %464 = vmatpush.msra.mxu0 %v436
        %465 = vmatpush.msra.mxu0 %v435
        %466 = vmatmul.f32.gmra.mxu0 %v445
        %v467 = vpop.f32.mrf.mxu0
        %v468 = vadd.f32 0.0, %v467
        %469 = vmatmul.f32.gmra.mxu0 %v448
        %v470 = vpop.f32.mrf.mxu0
        %v471 = vadd.f32 0.0, %v470
        %472 = vdwg.mxu0
        %v473 = vadd.f32 %v309, %v468
        %v474 = vadd.f32 %v310, %v471
        %v476 = vsel %vm313, %v473, 0
        %v479 = vsel %vm313, %v474, 0
        %481 = vmatpush.msra.mxu0 0.0
        %482 = vmatpush.msra.mxu0 0.0
        %483 = vmatpush.msra.mxu0 0.0
        %484 = vmatpush.msra.mxu0 0.0
        %485 = vmatpush.msra.mxu0 0.0
        %486 = vmatpush.msra.mxu0 0.0
        %487 = vmatpush.msra.mxu0 0.0
        %488 = vmatpush.msra.mxu0 0.0
        %489 = vmatpush.msra.mxu0 0.0
        %490 = vmatpush.msra.mxu0 0.0
        %491 = vmatpush.msra.mxu0 0.0
        %492 = vmatpush.msra.mxu0 0.0
        %493 = vmatpush.msra.mxu0 %v443
        %494 = vmatpush.msra.mxu0 %v442
        %495 = vmatpush.msra.mxu0 %v441
        %496 = vmatpush.msra.mxu0 %v440
        %497 = vmatmul.f32.gmra.mxu0 %v476
        %v498 = vpop.f32.mrf.mxu0
        %v499 = vadd.f32 0.0, %v498
        %500 = vmatmul.f32.gmra.mxu0 %v479
        %v501 = vpop.f32.mrf.mxu0
        %v502 = vadd.f32 0.0, %v501
        %503 = vdwg.mxu0
        %v504 = vadd.f32 %v473, %v499
        %v505 = vadd.f32 %v474, %v502
        %p506 = scmp.lt.s32.totalorder %s24, 1
        // Predicated region
        $region57: #{tpu_custom_call.1} parent=39 // pred_check
          %p507 = pneg %p506
        $region58: #{tpu_custom_call.1} parent=39 // pred_check_branch
          %509 = sbr.rel (%p507) target = $region60
        $region59: #{tpu_custom_call.1} parent=39 // pred_region
          %510 = vst.msk [vmem:[#allocation8] sm:$0xff] %vm313, %v504
          %511 = vst.msk [vmem:[#allocation8 + $0x8] sm:$0xff] %vm313, %v505
        $region60: #{tpu_custom_call.1} parent=39 // pred_fallthru
          _
        %p512 = scmp.eq.s32.totalorder %s24, 1
        // Predicated region
        $region61: #{tpu_custom_call.1} parent=39 // pred_check
          %p513 = pneg %p512
        $region62: #{tpu_custom_call.1} parent=39 // pred_check_branch
          %515 = sbr.rel (%p513) target = $region64
        $region63: #{tpu_custom_call.1} parent=39 // pred_region
          %v516 = vsel %vm313, %v504, 0.0
          %517 = vadd.xlane.f32.xlu0 %v516
          %v518 = vpop.xlane.xlu0 %517
          %v519 = vsel %vm313, %v505, 0.0
          %520 = vadd.xlane.f32.xlu0 %v519
          %v521 = vpop.xlane.xlu0 %520
          %v522 = vrcp.pop 32.0
          %v523 = vmul.f32 32.0, %v522
          %v524 = vsub.f32 1.0, %v523
          %v525 = vmul.f32 %v522, %v524
          %v526 = vadd.f32 %v522, %v525
          %vm527 = vweird.f32 %v522
          %v528 = vsel %vm527, %v522, %v526
          %v529 = vmul.f32 %v518, %v528
          %v530 = vmul.f32 %v521, %v528
          %v531 = vsub.f32 %v504, %v529
          %v532 = vsub.f32 %v505, %v530
          %v533 = vmul.f32 %v531, %v531
          %v534 = vmul.f32 %v532, %v532
          %v535 = vsel %vm313, %v533, 0.0
          %536 = vadd.xlane.f32.xlu0 %v535
          %v537 = vpop.xlane.xlu0 %536
          %v538 = vsel %vm313, %v534, 0.0
          %539 = vadd.xlane.f32.xlu0 %v538
          %v540 = vpop.xlane.xlu0 %539
          %v541 = vrcp.pop 31.0
          %v542 = vmul.f32 31.0, %v541
          %v543 = vsub.f32 1.0, %v542
          %v544 = vmul.f32 %v541, %v543
          %v545 = vadd.f32 %v541, %v544
          %vm546 = vweird.f32 %v541
          %v547 = vsel %vm546, %v541, %v545
          %v548 = vmul.f32 %v537, %v547
          %v549 = vmul.f32 %v540, %v547
          %v550 = vrsqrt.pop %v548
          %v551 = vmul.f32 %v550, %v548
          %v552 = vmul.f32 %v551, %v550
          %v553 = vmul.f32 0.5, %v552
          %v554 = vsub.f32 1.5, %v553
          %v555 = vmul.f32 %v550, %v554
          %v556 = vmul.f32 %v548, %v555
          %vm557 = vcmp.eq.f32.partialorder %v548, inf
          %v558 = vsel %vm557, %v548, %v556
          %vm559 = vcmp.eq.f32.partialorder %v548, 0.0
          %v560 = vand.u32 %v548, 2147483648
          %v561 = vsel %vm559, %v560, %v558
          %v562 = vrsqrt.pop %v549
          %v563 = vmul.f32 %v562, %v549
          %v564 = vmul.f32 %v563, %v562
          %v565 = vmul.f32 0.5, %v564
          %v566 = vsub.f32 1.5, %v565
          %v567 = vmul.f32 %v562, %v566
          %v568 = vmul.f32 %v549, %v567
          %vm569 = vcmp.eq.f32.partialorder %v549, inf
          %v570 = vsel %vm569, %v549, %v568
          %vm571 = vcmp.eq.f32.partialorder %v549, 0.0
          %v572 = vand.u32 %v549, 2147483648
          %v573 = vsel %vm571, %v572, %v570
          %v574 = vld [vmem:[%s3] sm:$0x1]
          %v575 = vld [vmem:[%s4] sm:$0x1]
          %v577 = vperm.slane %v574, 0
          %v579 = vmul.f32 %v577, %v531
          %v580 = vmul.f32 %v577, %v532
          %v581 = vadd.f32 %v561, 1e-06
          %v582 = vadd.f32 %v573, 1e-06
          %v583 = vrcp.pop %v581
          %v584 = vmul.f32 %v581, %v583
          %v585 = vsub.f32 1.0, %v584
          %v586 = vmul.f32 %v583, %v585
          %v587 = vadd.f32 %v583, %v586
          %vm588 = vweird.f32 %v581
          %vm589 = vweird.f32 %v583
          %vm590 = vmor %vm588, %vm589
          %v591 = vsel %vm590, %v583, %v587
          %v592 = vand.u32 2147483647, %v581
          %vm593 = vcmp.eq.f32.partialorder %v592, 8.507059e+37
          %v594 = vand.u32 %v581, 2147483648
          %v595 = vor.u32 1.1754944e-38, %v594
          %v596 = vsel %vm593, %v595, %v591
          %v597 = vmul.f32 %v579, %v596
          %v598 = vrcp.pop %v582
          %v599 = vmul.f32 %v582, %v598
          %v600 = vsub.f32 1.0, %v599
          %v601 = vmul.f32 %v598, %v600
          %v602 = vadd.f32 %v598, %v601
          %vm603 = vweird.f32 %v582
          %vm604 = vweird.f32 %v598
          %vm605 = vmor %vm603, %vm604
          %v606 = vsel %vm605, %v598, %v602
          %v607 = vand.u32 2147483647, %v582
          %vm608 = vcmp.eq.f32.partialorder %v607, 8.507059e+37
          %v609 = vand.u32 %v582, 2147483648
          %v610 = vor.u32 1.1754944e-38, %v609
          %v611 = vsel %vm608, %v610, %v606
          %v612 = vmul.f32 %v580, %v611
          %v614 = vperm.slane %v575, 0
          %v616 = vadd.f32 %v597, %v614
          %v617 = vadd.f32 %v612, %v614
          %618 = vst.msk [vmem:[#allocation8] sm:$0xff] %vm313, %v616
          %619 = vst.msk [vmem:[#allocation8 + $0x8] sm:$0xff] %vm313, %v617
        $region64: #{tpu_custom_call.1} parent=39 // pred_fallthru
          _
        // Predicated region
        $region65: #{tpu_custom_call.1} parent=39 // pred_check
          %p620 = pneg %p169
        $region66: #{tpu_custom_call.1} parent=39 // pred_check_branch
          %622 = sbr.rel (%p620) target = $region68
        $region67: #{tpu_custom_call.1} parent=39 // pred_region
          %s623 = smul.u32 2, %s23
          %625 = vsyncadd [#allocation4], 0
          %s626 = smul.addr %s623, 8
          %s627 = scalar_lea.hbm %s5, %s626
          %s628 = sshll.u32 [#allocation8], 4
          %s629 = int_to_ptr.vmem [resolvable:$true] %s628
          %s630 = sshll.u32 %s627, 4
          %s631 = int_to_ptr.hbm [resolvable:$true] %s630
          %636 = dma.vmem_to_hbm [thread:$0]  %s629, 256, %s631, [#allocation4], 128, 128, 8
        $region68: #{tpu_custom_call.1} parent=39 // pred_fallthru
          _
        // Predicated region
        $region69: #{tpu_custom_call.1} parent=39 // pred_check
          %p637 = pneg %p169
        $region70: #{tpu_custom_call.1} parent=39 // pred_check_branch
          %639 = sbr.rel (%p637) target = $region72
        $region71: #{tpu_custom_call.1} parent=39 // pred_region
          %641 = dma.done [#allocation4], 256
        $region72: #{tpu_custom_call.1} parent=39 // pred_fallthru
          _
      $region40: #{tpu_custom_call.1} parent=5 // pred_fallthru
        _
      %p642 = scmp.le.s32.totalorder 2, %s14
      // Predicated region
      $region73: #{tpu_custom_call.1} parent=5 // pred_check
        %p643 = pneg %p642
      $region74: #{tpu_custom_call.1} parent=5 // pred_check_branch
        %645 = sbr.rel (%p643) target = $region76
      $region75: #{tpu_custom_call.1} parent=5 // pred_region
        %s646 = ssub.s32 %s14, 2
      $region76: #{tpu_custom_call.1} parent=5 // pred_fallthru
        _
    $region6: #{tpu_custom_call.1} parent=1 // loop_footer
      %s18 = sadd.s32 1, %s14
    $region7: #{tpu_custom_call.1} parent=1 // loop_footer_branch
      %13 = sbr.rel target = $region3
    $region8: #{tpu_custom_call.1} parent=1 // loop_exit
      _
    %647 = vsyncpa [#allocation3], 1
    %s648 = scalar_lea.sflag [#allocation3], 1
    %649 = vsyncpa %s648, 1
    %650 = vsyncpa [#allocation6], 1
    %651 = vsyncpa [#allocation4], 1
    %s652 = scalar_lea.sflag [#allocation4], 1
    %653 = vsyncpa %s652, 1

</llo_original>
